<compile_context>
chip_gen: v5e
topology: v5e:2x2
jax: 0.10.0
libtpu: 0.0.40
codegen_flags: <defaults>
</compile_context>

<pallas_src>
import jax
import jax.numpy as jnp
from jax.experimental import pallas as pl
from jax.experimental.pallas import tpu as pltpu


def critic_kernel(sa_ref, w14_ref, b14_ref, w2_ref, b2_ref, w5_ref, b5_ref,
                  w3p_ref, w6p_ref, b36_ref, q_ref):
    sa = sa_ref[...]                                            # (TB, SD+AD) bf16

    # Layer 1, both heads fused: one K=(SD+AD) MXU issue -> (TB, 2H) f32 acc.
    hg1 = jnp.dot(sa, w14_ref[...], preferred_element_type=jnp.float32)
    hg1 = jnp.maximum(hg1 + b14_ref[...], 0.0)                  # ReLU in f32

    h = w2_ref.shape[0]                                         # hidden (256)
    h1 = hg1[:, :h].astype(jnp.bfloat16)                        # head-1 hidden
    g1 = hg1[:, h:].astype(jnp.bfloat16)                        # head-2 hidden

    # Layer 2, per head (kept as two independent chains -> ILP for the scheduler;
    # a block-diagonal fusion here would double layer-2 weight HBM traffic).
    h2 = jnp.maximum(
        jnp.dot(h1, w2_ref[...], preferred_element_type=jnp.float32) + b2_ref[...], 0.0)
    g2 = jnp.maximum(
        jnp.dot(g1, w5_ref[...], preferred_element_type=jnp.float32) + b5_ref[...], 0.0)

    # Head projections fused into a single lane-packed (TB, 2) result:
    #   column 0 <- q1 (w3p = [w3 | 0]),  column 1 <- q2 (w6p = [0 | w6]).
    q = (jnp.dot(h2.astype(jnp.bfloat16), w3p_ref[...], preferred_element_type=jnp.float32)
         + jnp.dot(g2.astype(jnp.bfloat16), w6p_ref[...], preferred_element_type=jnp.float32)
         + b36_ref[...])
    q_ref[...] = q.astype(q_ref.dtype)


def critic_forward(state, action, kparams, *, block_b=512):
    """Returns (q1, q2), each (B, 1) float32.  kparams from prepare_kernel_params."""
    B = state.shape[0]
    sa = jnp.concatenate([state, action], axis=1).astype(jnp.bfloat16)   # (B, SD+AD)
    K = sa.shape[1]

    # Batch tiling: single block for small B, otherwise TB=block_b (multiple of 8)
    # with the batch padded up to a whole number of tiles.
    tb = B if B <= block_b else block_b
    grid_b = pl.cdiv(B, tb)
    b_padded = grid_b * tb
    if b_padded != B:
        sa = jnp.pad(sa, ((0, b_padded - B), (0, 0)))

    vmem = pltpu.MemorySpace.VMEM

    def wspec(arr):  # full, grid-invariant (VMEM-resident) block
        return pl.BlockSpec(arr.shape, lambda i: (0, 0), memory_space=vmem)

    q = pl.pallas_call(
        critic_kernel,
        out_shape=jax.ShapeDtypeStruct((b_padded, 2), jnp.float32),
        grid=(grid_b,),
        in_specs=[
            pl.BlockSpec((tb, K), lambda i: (i, 0), memory_space=vmem),  # sa tile
            wspec(kparams["w14"]), wspec(kparams["b14"]),
            wspec(kparams["w2"]),  wspec(kparams["b2"]),
            wspec(kparams["w5"]),  wspec(kparams["b5"]),
            wspec(kparams["w3p"]), wspec(kparams["w6p"]),
            wspec(kparams["b36"]),
        ],
        out_specs=pl.BlockSpec((tb, 2), lambda i: (i, 0), memory_space=vmem),
        compiler_params=pltpu.CompilerParams(dimension_semantics=("parallel",)),
    )(sa, kparams["w14"], kparams["b14"], kparams["w2"], kparams["b2"],
      kparams["w5"], kparams["b5"], kparams["w3p"], kparams["w6p"], kparams["b36"])

    q = q[:B]
    return q[:, 0:1], q[:, 1:2]


# ----------------------------- parameters ------------------------------------

def init_linear(key, in_features, out_features):
    """Mimics PyTorch nn.Linear default init (uniform +-1/sqrt(fan_in)).
    Weight returned as (in_features, out_features) float32."""
    kw, kb = jax.random.split(key)
    bound = 1.0 / jnp.sqrt(jnp.float32(in_features))
    w = jax.random.uniform(kw, (in_features, out_features), jnp.float32, -bound, bound)
    b = jax.random.uniform(kb, (1, out_features), jnp.float32, -bound, bound)
    return w, b


def init_critic_params(key, state_dim, action_dim, hidden=256):
    keys = jax.random.split(key, 6)
    w1, b1 = init_linear(keys[0], state_dim + action_dim, hidden)
    w2, b2 = init_linear(keys[1], hidden, hidden)
    w3, b3 = init_linear(keys[2], hidden, 1)
    w4, b4 = init_linear(keys[3], state_dim + action_dim, hidden)
    w5, b5 = init_linear(keys[4], hidden, hidden)
    w6, b6 = init_linear(keys[5], hidden, 1)
    return {"w1": w1, "b1": b1, "w2": w2, "b2": b2, "w3": w3, "b3": b3,
            "w4": w4, "b4": b4, "w5": w5, "b5": b5, "w6": w6, "b6": b6}


def prepare_kernel_params(p):
    """Fuse + cast the PyTorch-layout params into the kernel layout (bf16 weights,
    f32 biases).  TODO(synk): on v7x, fp8 weights (not int8) would halve HBM again."""
    w14 = jnp.concatenate([p["w1"], p["w4"]], axis=1).astype(jnp.bfloat16)   # (SD+AD, 2H)
    b14 = jnp.concatenate([p["b1"], p["b4"]], axis=1)                        # (1, 2H) f32
    z3 = jnp.zeros_like(p["w3"])
    z6 = jnp.zeros_like(p["w6"])
    w3p = jnp.concatenate([p["w3"], z3], axis=1).astype(jnp.bfloat16)        # (H, 2) = [w3 | 0]
    w6p = jnp.concatenate([z6, p["w6"]], axis=1).astype(jnp.bfloat16)        # (H, 2) = [0 | w6]
    b36 = jnp.concatenate([p["b3"], p["b6"]], axis=1)                        # (1, 2) f32
    return {"w14": w14, "b14": b14,
            "w2": p["w2"].astype(jnp.bfloat16), "b2": p["b2"],
            "w5": p["w5"].astype(jnp.bfloat16), "b5": p["b5"],
            "w3p": w3p, "w6p": w6p, "b36": b36}


# ----------------------------- reference -------------------------------------

def critic_reference(state, action, p, compute_dtype=jnp.bfloat16):
    """Same math as the PyTorch module; matmul operands cast to compute_dtype with
    f32 accumulation so the numerics mirror the kernel's MXU path."""
    def mm(x, w):
        return jnp.dot(x.astype(compute_dtype), w.astype(compute_dtype),
                       preferred_element_type=jnp.float32)
    sa = jnp.concatenate([state, action], axis=1)
    h = jax.nn.relu(mm(sa, p["w1"]) + p["b1"])
    h = jax.nn.relu(mm(h, p["w2"]) + p["b2"])
    q1 = mm(h, p["w3"]) + p["b3"]
    g = jax.nn.relu(mm(sa, p["w4"]) + p["b4"])
    g = jax.nn.relu(mm(g, p["w5"]) + p["b5"])
    q2 = mm(g, p["w6"]) + p["b6"]
    return q1, q2


if __name__ == "__main__":
    key = jax.random.PRNGKey(0)
    STATE_DIM, ACTION_DIM, BATCH = 16, 8, 2

    k_param, k_state, k_action = jax.random.split(key, 3)
    params = init_critic_params(k_param, STATE_DIM, ACTION_DIM)
    kparams = prepare_kernel_params(params)

    state = jax.random.normal(k_state, (BATCH, STATE_DIM), jnp.float32)
    action = jax.random.normal(k_action, (BATCH, ACTION_DIM), jnp.float32)

    q1, q2 = critic_forward(state, action, kparams)
    jax.block_until_ready((q1, q2))

    q1_ref, q2_ref = critic_reference(state, action, params)
    assert q1.shape == (BATCH, 1) and q2.shape == (BATCH, 1)
    assert jnp.allclose(q1, q1_ref, atol=1e-3, rtol=1e-3)
    assert jnp.allclose(q2, q2_ref, atol=1e-3, rtol=1e-3)

    # Exercise the batch-tiled (gridded) path, including a ragged final tile.
    kb1, kb2 = jax.random.split(jax.random.PRNGKey(1))
    BIG = 600
    big_state = jax.random.normal(kb1, (BIG, STATE_DIM), jnp.float32)
    big_action = jax.random.normal(kb2, (BIG, ACTION_DIM), jnp.float32)
    bq1, bq2 = critic_forward(big_state, big_action, kparams, block_b=256)
    jax.block_until_ready((bq1, bq2))
    bq1_ref, bq2_ref = critic_reference(big_state, big_action, params)
    assert bq1.shape == (BIG, 1) and bq2.shape == (BIG, 1)
    assert jnp.allclose(bq1, bq1_ref, atol=1e-3, rtol=1e-3)
    assert jnp.allclose(bq2, bq2_ref, atol=1e-3, rtol=1e-3)

    print("KERNEL_OK")
</pallas_src>

<mosaic_0001>
module attributes {stable_mosaic.version = 11 : i64} {
  func.func @critic_kernel(%arg0: i32, %arg1: memref<2x24xbf16, #tpu.memory_space<vmem>>, %arg2: memref<24x512xbf16, #tpu.memory_space<vmem>>, %arg3: memref<1x512xf32, #tpu.memory_space<vmem>>, %arg4: memref<256x256xbf16, #tpu.memory_space<vmem>>, %arg5: memref<1x256xf32, #tpu.memory_space<vmem>>, %arg6: memref<256x256xbf16, #tpu.memory_space<vmem>>, %arg7: memref<1x256xf32, #tpu.memory_space<vmem>>, %arg8: memref<256x2xbf16, #tpu.memory_space<vmem>>, %arg9: memref<256x2xbf16, #tpu.memory_space<vmem>>, %arg10: memref<1x2xf32, #tpu.memory_space<vmem>>, %arg11: memref<2x2xf32, #tpu.memory_space<vmem>>) attributes {dimension_semantics = [#tpu.dimension_semantics<parallel>], iteration_bounds = array<i64: 1>, scalar_prefetch = 0 : i64, scratch_operands = 0 : i64, tpu.core_type = #tpu.core_type<tc>, window_params = [{transform_indices = @transform_0, window_bounds = array<i64: 2, 24>}, {pipeline_mode = #tpu.pipeline_mode<synchronous>, transform_indices = @transform_1, window_bounds = array<i64: 24, 512>}, {pipeline_mode = #tpu.pipeline_mode<synchronous>, transform_indices = @transform_2, window_bounds = array<i64: 1, 512>}, {pipeline_mode = #tpu.pipeline_mode<synchronous>, transform_indices = @transform_3, window_bounds = array<i64: 256, 256>}, {pipeline_mode = #tpu.pipeline_mode<synchronous>, transform_indices = @transform_4, window_bounds = array<i64: 1, 256>}, {pipeline_mode = #tpu.pipeline_mode<synchronous>, transform_indices = @transform_5, window_bounds = array<i64: 256, 256>}, {pipeline_mode = #tpu.pipeline_mode<synchronous>, transform_indices = @transform_6, window_bounds = array<i64: 1, 256>}, {pipeline_mode = #tpu.pipeline_mode<synchronous>, transform_indices = @transform_7, window_bounds = array<i64: 256, 2>}, {pipeline_mode = #tpu.pipeline_mode<synchronous>, transform_indices = @transform_8, window_bounds = array<i64: 256, 2>}, {pipeline_mode = #tpu.pipeline_mode<synchronous>, transform_indices = @transform_9, window_bounds = array<i64: 1, 2>}, {transform_indices = @transform_10, window_bounds = array<i64: 2, 2>}]} {
    %c0 = arith.constant 0 : index
    %c0_0 = arith.constant 0 : index
    %0 = vector.load %arg1[%c0, %c0_0] : memref<2x24xbf16, #tpu.memory_space<vmem>>, vector<2x24xbf16>
    %c0_1 = arith.constant 0 : index
    %c0_2 = arith.constant 0 : index
    %1 = vector.load %arg2[%c0_1, %c0_2] : memref<24x512xbf16, #tpu.memory_space<vmem>>, vector<24x512xbf16>
    %cst = arith.constant dense<0.000000e+00> : vector<2x512xf32>
    %2 = tpu.matmul %0, %1, %cst {dimension_numbers = #tpu.dot_dimension_numbers<[1], [0], [0], [1], [0, 0, 1, 1], [], []>} : vector<2x24xbf16>, vector<24x512xbf16>, vector<2x512xf32> -> vector<2x512xf32>
    %c0_3 = arith.constant 0 : index
    %c0_4 = arith.constant 0 : index
    %3 = vector.load %arg3[%c0_3, %c0_4] : memref<1x512xf32, #tpu.memory_space<vmem>>, vector<1x512xf32>
    %4 = vector.broadcast %3 : vector<1x512xf32> to vector<2x512xf32>
    %5 = arith.addf %2, %4 : vector<2x512xf32>
    %cst_5 = arith.constant 0.000000e+00 : f32
    %6 = vector.broadcast %cst_5 : f32 to vector<2x512xf32>
    %7 = arith.maximumf %5, %6 : vector<2x512xf32>
    %8 = vector.extract_strided_slice %7 {offsets = [0, 0], sizes = [2, 256], strides = [1, 1]} : vector<2x512xf32> to vector<2x256xf32>
    %9 = arith.truncf %8 : vector<2x256xf32> to vector<2x256xbf16>
    %10 = vector.extract_strided_slice %7 {offsets = [0, 256], sizes = [2, 256], strides = [1, 1]} : vector<2x512xf32> to vector<2x256xf32>
    %11 = arith.truncf %10 : vector<2x256xf32> to vector<2x256xbf16>
    %c0_6 = arith.constant 0 : index
    %c0_7 = arith.constant 0 : index
    %12 = vector.load %arg4[%c0_6, %c0_7] : memref<256x256xbf16, #tpu.memory_space<vmem>>, vector<256x256xbf16>
    %cst_8 = arith.constant dense<0.000000e+00> : vector<2x256xf32>
    %13 = tpu.matmul %9, %12, %cst_8 {dimension_numbers = #tpu.dot_dimension_numbers<[1], [0], [0], [1], [0, 0, 1, 1], [], []>} : vector<2x256xbf16>, vector<256x256xbf16>, vector<2x256xf32> -> vector<2x256xf32>
    %c0_9 = arith.constant 0 : index
    %c0_10 = arith.constant 0 : index
    %14 = vector.load %arg5[%c0_9, %c0_10] : memref<1x256xf32, #tpu.memory_space<vmem>>, vector<1x256xf32>
    %15 = vector.broadcast %14 : vector<1x256xf32> to vector<2x256xf32>
    %16 = arith.addf %13, %15 : vector<2x256xf32>
    %cst_11 = arith.constant 0.000000e+00 : f32
    %17 = vector.broadcast %cst_11 : f32 to vector<2x256xf32>
    %18 = arith.maximumf %16, %17 : vector<2x256xf32>
    %c0_12 = arith.constant 0 : index
    %c0_13 = arith.constant 0 : index
    %19 = vector.load %arg6[%c0_12, %c0_13] : memref<256x256xbf16, #tpu.memory_space<vmem>>, vector<256x256xbf16>
    %cst_14 = arith.constant dense<0.000000e+00> : vector<2x256xf32>
    %20 = tpu.matmul %11, %19, %cst_14 {dimension_numbers = #tpu.dot_dimension_numbers<[1], [0], [0], [1], [0, 0, 1, 1], [], []>} : vector<2x256xbf16>, vector<256x256xbf16>, vector<2x256xf32> -> vector<2x256xf32>
    %c0_15 = arith.constant 0 : index
    %c0_16 = arith.constant 0 : index
    %21 = vector.load %arg7[%c0_15, %c0_16] : memref<1x256xf32, #tpu.memory_space<vmem>>, vector<1x256xf32>
    %22 = vector.broadcast %21 : vector<1x256xf32> to vector<2x256xf32>
    %23 = arith.addf %20, %22 : vector<2x256xf32>
    %cst_17 = arith.constant 0.000000e+00 : f32
    %24 = vector.broadcast %cst_17 : f32 to vector<2x256xf32>
    %25 = arith.maximumf %23, %24 : vector<2x256xf32>
    %26 = arith.truncf %18 : vector<2x256xf32> to vector<2x256xbf16>
    %c0_18 = arith.constant 0 : index
    %c0_19 = arith.constant 0 : index
    %27 = vector.load %arg8[%c0_18, %c0_19] : memref<256x2xbf16, #tpu.memory_space<vmem>>, vector<256x2xbf16>
    %cst_20 = arith.constant dense<0.000000e+00> : vector<2x2xf32>
    %28 = tpu.matmul %26, %27, %cst_20 {dimension_numbers = #tpu.dot_dimension_numbers<[1], [0], [0], [1], [0, 0, 1, 1], [], []>} : vector<2x256xbf16>, vector<256x2xbf16>, vector<2x2xf32> -> vector<2x2xf32>
    %29 = arith.truncf %25 : vector<2x256xf32> to vector<2x256xbf16>
    %c0_21 = arith.constant 0 : index
    %c0_22 = arith.constant 0 : index
    %30 = vector.load %arg9[%c0_21, %c0_22] : memref<256x2xbf16, #tpu.memory_space<vmem>>, vector<256x2xbf16>
    %cst_23 = arith.constant dense<0.000000e+00> : vector<2x2xf32>
    %31 = tpu.matmul %29, %30, %cst_23 {dimension_numbers = #tpu.dot_dimension_numbers<[1], [0], [0], [1], [0, 0, 1, 1], [], []>} : vector<2x256xbf16>, vector<256x2xbf16>, vector<2x2xf32> -> vector<2x2xf32>
    %32 = arith.addf %28, %31 : vector<2x2xf32>
    %c0_24 = arith.constant 0 : index
    %c0_25 = arith.constant 0 : index
    %33 = vector.load %arg10[%c0_24, %c0_25] : memref<1x2xf32, #tpu.memory_space<vmem>>, vector<1x2xf32>
    %34 = vector.broadcast %33 : vector<1x2xf32> to vector<2x2xf32>
    %35 = arith.addf %32, %34 : vector<2x2xf32>
    %c0_26 = arith.constant 0 : index
    %c0_27 = arith.constant 0 : index
    %36 = vector.load %arg11[%c0_26, %c0_27] : memref<2x2xf32, #tpu.memory_space<vmem>>, vector<2x2xf32>
    tpu.vector_store %arg11[%c0_26, %c0_27], %35 {strides = array<i32>} : memref<2x2xf32, #tpu.memory_space<vmem>>, vector<2x2xf32>,
    return
  }
  func.func @transform_0(%arg0: i32) -> (i32, i32) {
    %c0_i32 = arith.constant 0 : i32
    %c0_i32_0 = arith.constant 0 : i32
    return %arg0, %c0_i32 : i32, i32
  }
  func.func @transform_1(%arg0: i32) -> (i32, i32) {
    %c0_i32 = arith.constant 0 : i32
    %c0_i32_0 = arith.constant 0 : i32
    %c0_i32_1 = arith.constant 0 : i32
    return %c0_i32, %c0_i32_0 : i32, i32
  }
  func.func @transform_2(%arg0: i32) -> (i32, i32) {
    %c0_i32 = arith.constant 0 : i32
    %c0_i32_0 = arith.constant 0 : i32
    %c0_i32_1 = arith.constant 0 : i32
    return %c0_i32, %c0_i32_0 : i32, i32
  }
  func.func @transform_3(%arg0: i32) -> (i32, i32) {
    %c0_i32 = arith.constant 0 : i32
    %c0_i32_0 = arith.constant 0 : i32
    %c0_i32_1 = arith.constant 0 : i32
    return %c0_i32, %c0_i32_0 : i32, i32
  }
  func.func @transform_4(%arg0: i32) -> (i32, i32) {
    %c0_i32 = arith.constant 0 : i32
    %c0_i32_0 = arith.constant 0 : i32
    %c0_i32_1 = arith.constant 0 : i32
    return %c0_i32, %c0_i32_0 : i32, i32
  }
  func.func @transform_5(%arg0: i32) -> (i32, i32) {
    %c0_i32 = arith.constant 0 : i32
    %c0_i32_0 = arith.constant 0 : i32
    %c0_i32_1 = arith.constant 0 : i32
    return %c0_i32, %c0_i32_0 : i32, i32
  }
  func.func @transform_6(%arg0: i32) -> (i32, i32) {
    %c0_i32 = arith.constant 0 : i32
    %c0_i32_0 = arith.constant 0 : i32
    %c0_i32_1 = arith.constant 0 : i32
    return %c0_i32, %c0_i32_0 : i32, i32
  }
  func.func @transform_7(%arg0: i32) -> (i32, i32) {
    %c0_i32 = arith.constant 0 : i32
    %c0_i32_0 = arith.constant 0 : i32
    %c0_i32_1 = arith.constant 0 : i32
    return %c0_i32, %c0_i32_0 : i32, i32
  }
  func.func @transform_8(%arg0: i32) -> (i32, i32) {
    %c0_i32 = arith.constant 0 : i32
    %c0_i32_0 = arith.constant 0 : i32
    %c0_i32_1 = arith.constant 0 : i32
    return %c0_i32, %c0_i32_0 : i32, i32
  }
  func.func @transform_9(%arg0: i32) -> (i32, i32) {
    %c0_i32 = arith.constant 0 : i32
    %c0_i32_0 = arith.constant 0 : i32
    %c0_i32_1 = arith.constant 0 : i32
    return %c0_i32, %c0_i32_0 : i32, i32
  }
  func.func @transform_10(%arg0: i32) -> (i32, i32) {
    %c0_i32 = arith.constant 0 : i32
    %c0_i32_0 = arith.constant 0 : i32
    return %arg0, %c0_i32 : i32, i32
  }
}

</mosaic_0001>

<llo_original>
// kernel: tpu_custom_call.1
$region0: #{tpu_custom_call.1}
  #allocation0 [shape = 'u32[]', space=smem, size = 0x4, offset = 0x4, fixed_abs, tag = 'smem constant byte address 0x4 - core index']
  #allocation1 [shape = 'u32[72,128]{1,0:T(1,128)}', space=vmem, size = 0x9000, scoped, tag = 'internal scratch']
  %s0 = inlined_call_operand.hbm [shape: bf16[2,24], index: 0, kind: input, shape index: {}]
  %s1 = inlined_call_operand.hbm [shape: bf16[24,512], index: 1, kind: input, shape index: {}]
  %s2 = inlined_call_operand.hbm [shape: f32[1,512], index: 2, kind: input, shape index: {}]
  %s3 = inlined_call_operand.vmem [shape: bf16[256,256], index: 3, kind: input, shape index: {}]
  %s4 = inlined_call_operand.vmem [shape: f32[1,256], index: 4, kind: input, shape index: {}]
  %s5 = inlined_call_operand.hbm [shape: bf16[256,256], index: 5, kind: input, shape index: {}]
  %s6 = inlined_call_operand.vmem [shape: f32[1,256], index: 6, kind: input, shape index: {}]
  %s7 = inlined_call_operand.vmem [shape: bf16[256,2], index: 7, kind: input, shape index: {}]
  %s8 = inlined_call_operand.vmem [shape: bf16[256,2], index: 8, kind: input, shape index: {}]
  %s9 = inlined_call_operand.vmem [shape: f32[1,2], index: 9, kind: input, shape index: {}]
  %s10 = inlined_call_operand.hbm [shape: f32[2,2], index: 10, kind: output, shape index: {}]
  %s11 = sld [smem:[#allocation0]]
  $region66: #{tpu_custom_call.1} parent=0
    _
  %s13 = ssub.s32 1, %s11
  %s14 = scalar_select 0, %s13, %s11
  $region1: #{tpu_custom_call.1} parent=0
    #allocation2 [shape = 'u8[512]{0}', space=vmem, size = 0x400, scoped, tag = 'input window, operand 0, single buffered']
    #allocation3 [shape = 's32[1]{0}', space=sflag, size = 0x4, scoped, tag = 'scoped memory for tpu_custom_call.1']
    #allocation4 [shape = 's32[1]{0}', space=sflag, size = 0x4, scoped, tag = 'scoped memory for tpu_custom_call.1']
    #allocation5 [shape = 'u8[24576]{0}', space=vmem, size = 0x6000, scoped, tag = 'input window, operand 1, single buffered']
    #allocation6 [shape = 's32[1]{0}', space=sflag, size = 0x4, scoped, tag = 'scoped memory for tpu_custom_call.1']
    #allocation7 [shape = 'u8[2048]{0}', space=vmem, size = 0x800, scoped, tag = 'input window, operand 2, single buffered']
    #allocation8 [shape = 'u8[131072]{0}', space=vmem, size = 0x20000, scoped, tag = 'input window, operand 5, single buffered']
    #allocation9 [shape = 's32[1]{0}', space=sflag, size = 0x4, scoped, tag = 'scoped memory for tpu_custom_call.1']
    #allocation10 [shape = 'u8[1024]{0}', space=vmem, size = 0x400, scoped, tag = 'output window, operand 0, single buffered']
    %15 = vsyncpa [#allocation3], 0
    %16 = vsyncpa [#allocation6], 0
    %17 = vsyncpa [#allocation9], 0
    %18 = vsyncpa [#allocation4], 0
    // Predicated region
    $region2: #{tpu_custom_call.1} parent=1 // pred_check
      _
    $region3: #{tpu_custom_call.1} parent=1 // pred_check_branch
      %20 = sbr.rel (0) target = $region5
    $region4: #{tpu_custom_call.1} parent=1 // pred_region
      %22 = vsyncadd [#allocation3], 0
      %s24 = sshll.u32 %s0, 4
      %s25 = int_to_ptr.hbm [resolvable:$true] %s24
      %s26 = sshll.u32 [#allocation2], 4
      %s27 = int_to_ptr.vmem [resolvable:$true] %s26
      %29 = dma.hbm_to_vmem [thread:$0]  %s25, 16, %s27, [#allocation3]
    $region5: #{tpu_custom_call.1} parent=1 // pred_fallthru
      _
    // Predicated region
    $region6: #{tpu_custom_call.1} parent=1 // pred_check
      _
    $region7: #{tpu_custom_call.1} parent=1 // pred_check_branch
      %31 = sbr.rel (0) target = $region9
    $region8: #{tpu_custom_call.1} parent=1 // pred_region
      %33 = vsyncadd [#allocation6], 0
      %s34 = sshll.u32 %s1, 4
      %s35 = int_to_ptr.hbm [resolvable:$true] %s34
      %s36 = sshll.u32 [#allocation5], 4
      %s37 = int_to_ptr.vmem [resolvable:$true] %s36
      %42 = dma.hbm_to_vmem [thread:$0]  %s35, 768, %s37, [#allocation6], 256, 256, 16
    $region9: #{tpu_custom_call.1} parent=1 // pred_fallthru
      _
    // Predicated region
    $region10: #{tpu_custom_call.1} parent=1 // pred_check
      _
    $region11: #{tpu_custom_call.1} parent=1 // pred_check_branch
      %44 = sbr.rel (0) target = $region13
    $region12: #{tpu_custom_call.1} parent=1 // pred_region
      %46 = vsyncadd [#allocation6], 0
      %s48 = sshll.u32 %s2, 4
      %s49 = int_to_ptr.hbm [resolvable:$true] %s48
      %s50 = sshll.u32 [#allocation7], 4
      %s51 = int_to_ptr.vmem [resolvable:$true] %s50
      %53 = dma.hbm_to_vmem [thread:$0]  %s49, 64, %s51, [#allocation6]
    $region13: #{tpu_custom_call.1} parent=1 // pred_fallthru
      _
    // Predicated region
    $region14: #{tpu_custom_call.1} parent=1 // pred_check
      _
    $region15: #{tpu_custom_call.1} parent=1 // pred_check_branch
      %55 = sbr.rel (0) target = $region17
    $region16: #{tpu_custom_call.1} parent=1 // pred_region
      _
    $region17: #{tpu_custom_call.1} parent=1 // pred_fallthru
      _
    // Predicated region
    $region18: #{tpu_custom_call.1} parent=1 // pred_check
      _
    $region19: #{tpu_custom_call.1} parent=1 // pred_check_branch
      %57 = sbr.rel (0) target = $region21
    $region20: #{tpu_custom_call.1} parent=1 // pred_region
      _
    $region21: #{tpu_custom_call.1} parent=1 // pred_fallthru
      _
    // Predicated region
    $region22: #{tpu_custom_call.1} parent=1 // pred_check
      _
    $region23: #{tpu_custom_call.1} parent=1 // pred_check_branch
      %59 = sbr.rel (0) target = $region25
    $region24: #{tpu_custom_call.1} parent=1 // pred_region
      %61 = vsyncadd [#allocation9], 0
      %s62 = sshll.u32 %s5, 4
      %s63 = int_to_ptr.hbm [resolvable:$true] %s62
      %s64 = sshll.u32 [#allocation8], 4
      %s65 = int_to_ptr.vmem [resolvable:$true] %s64
      %70 = dma.hbm_to_vmem [thread:$0]  %s63, 4096, %s65, [#allocation9], 128, 128, 8
    $region25: #{tpu_custom_call.1} parent=1 // pred_fallthru
      _
    // Predicated region
    $region26: #{tpu_custom_call.1} parent=1 // pred_check
      _
    $region27: #{tpu_custom_call.1} parent=1 // pred_check_branch
      %72 = sbr.rel (0) target = $region29
    $region28: #{tpu_custom_call.1} parent=1 // pred_region
      _
    $region29: #{tpu_custom_call.1} parent=1 // pred_fallthru
      _
    // Predicated region
    $region30: #{tpu_custom_call.1} parent=1 // pred_check
      _
    $region31: #{tpu_custom_call.1} parent=1 // pred_check_branch
      %74 = sbr.rel (0) target = $region33
    $region32: #{tpu_custom_call.1} parent=1 // pred_region
      _
    $region33: #{tpu_custom_call.1} parent=1 // pred_fallthru
      _
    // Predicated region
    $region34: #{tpu_custom_call.1} parent=1 // pred_check
      _
    $region35: #{tpu_custom_call.1} parent=1 // pred_check_branch
      %76 = sbr.rel (0) target = $region37
    $region36: #{tpu_custom_call.1} parent=1 // pred_region
      _
    $region37: #{tpu_custom_call.1} parent=1 // pred_fallthru
      _
    // Predicated region
    $region38: #{tpu_custom_call.1} parent=1 // pred_check
      _
    $region39: #{tpu_custom_call.1} parent=1 // pred_check_branch
      %78 = sbr.rel (0) target = $region41
    $region40: #{tpu_custom_call.1} parent=1 // pred_region
      _
    $region41: #{tpu_custom_call.1} parent=1 // pred_fallthru
      _
    // Predicated region
    $region42: #{tpu_custom_call.1} parent=1 // pred_check
      _
    $region43: #{tpu_custom_call.1} parent=1 // pred_check_branch
      %80 = sbr.rel (0) target = $region45
    $region44: #{tpu_custom_call.1} parent=1 // pred_region
      %82 = dma.done [#allocation3], 16
    $region45: #{tpu_custom_call.1} parent=1 // pred_fallthru
      _
    // Predicated region
    $region46: #{tpu_custom_call.1} parent=1 // pred_check
      _
    $region47: #{tpu_custom_call.1} parent=1 // pred_check_branch
      %84 = sbr.rel (0) target = $region49
    $region48: #{tpu_custom_call.1} parent=1 // pred_region
      %86 = dma.done [#allocation6], 768
    $region49: #{tpu_custom_call.1} parent=1 // pred_fallthru
      _
    // Predicated region
    $region50: #{tpu_custom_call.1} parent=1 // pred_check
      _
    $region51: #{tpu_custom_call.1} parent=1 // pred_check_branch
      %88 = sbr.rel (0) target = $region53
    $region52: #{tpu_custom_call.1} parent=1 // pred_region
      %90 = dma.done [#allocation6], 64
    $region53: #{tpu_custom_call.1} parent=1 // pred_fallthru
      _
    // Predicated region
    $region54: #{tpu_custom_call.1} parent=1 // pred_check
      _
    $region55: #{tpu_custom_call.1} parent=1 // pred_check_branch
      %92 = sbr.rel (0) target = $region57
    $region56: #{tpu_custom_call.1} parent=1 // pred_region
      %94 = dma.done [#allocation9], 4096
    $region57: #{tpu_custom_call.1} parent=1 // pred_fallthru
      _
    %v96 = vld [vmem:[#allocation2] sm:$0x1]
    %v97 = vld [vmem:[#allocation5] sm:$0xff]
    %v98 = vld [vmem:[#allocation5 + $0x8] sm:$0xff]
    %v99 = vld [vmem:[#allocation5 + $0x10] sm:$0xff]
    %v100 = vld [vmem:[#allocation5 + $0x18] sm:$0xff]
    %v101 = vld [vmem:[#allocation5 + $0x20] sm:$0xff]
    %v102 = vld [vmem:[#allocation5 + $0x28] sm:$0xff]
    %v103 = vld [vmem:[#allocation7] sm:$0xf]
    %v105 = vperm.slane %v103, 0
    %v106 = vperm.slane %v103, 1
    %v107 = vperm.slane %v103, 2
    %v108 = vperm.slane %v103, 3
    %v119 = vunpack.c.l.b16 %v97
    %v120 = vunpack.c.h.b16 %v97
    %v121 = vunpack.c.l.b16 %v98
    %v122 = vunpack.c.h.b16 %v98
    %v123 = vunpack.c.l.b16 %v99
    %v124 = vunpack.c.h.b16 %v99
    %v125 = vunpack.c.l.b16 %v100
    %v126 = vunpack.c.h.b16 %v100
    %v127 = vunpack.c.l.b16 %v101
    %v128 = vunpack.c.h.b16 %v101
    %v129 = vunpack.c.l.b16 %v102
    %v130 = vunpack.c.h.b16 %v102
    %v131 = vpack.c.b16 %v123, %v119
    %v132 = vpack.c.b16 %v124, %v120
    %v133 = vpack.c.b16 %v125, %v121
    %v134 = vpack.c.b16 %v126, %v122
    %v135 = vpack.c.b16 %v127, %v127
    %v136 = vpack.c.b16 %v128, %v128
    %v137 = vpack.c.b16 %v129, %v129
    %v138 = vpack.c.b16 %v130, %v130
    %vm143 = vcmask 195584
    %v145 = vsel %vm143, %v96, 0
    %vm147 = vcmask 1043456
    %v149 = vsel %vm147, %v135, 0
    %v152 = vsel %vm147, %v136, 0
    %v155 = vsel %vm147, %v137, 0
    %v158 = vsel %vm147, %v138, 0
    %160 = vmatpush.bf16.msra.mxu0 0
    %161 = vmatpush.bf16.msra.mxu0 0
    %162 = vmatpush.bf16.msra.mxu0 0
    %163 = vmatpush.bf16.msra.mxu0 0
    %164 = vmatpush.bf16.msra.mxu0 0
    %165 = vmatpush.bf16.msra.mxu0 0
    %166 = vmatpush.bf16.msra.mxu0 %v149
    %167 = vmatpush.bf16.msra.mxu0 %v131
    %168 = vmatmul.bf16.gmra.mxu0 %v145
    %v169 = vpop.f32.mrf.mxu0
    %v170 = vadd.f32 %v105, %v169
    %v171 = vpop.f32.mrf.mxu0
    %172 = vdwg.mxu0
    %173 = vmatpush.bf16.msra.mxu0 0
    %174 = vmatpush.bf16.msra.mxu0 0
    %175 = vmatpush.bf16.msra.mxu0 0
    %176 = vmatpush.bf16.msra.mxu0 0
    %177 = vmatpush.bf16.msra.mxu0 0
    %178 = vmatpush.bf16.msra.mxu0 0
    %179 = vmatpush.bf16.msra.mxu0 %v152
    %180 = vmatpush.bf16.msra.mxu0 %v132
    %181 = vmatmul.bf16.gmra.mxu0 %v145
    %v182 = vpop.f32.mrf.mxu0
    %v183 = vadd.f32 %v106, %v182
    %v184 = vpop.f32.mrf.mxu0
    %185 = vdwg.mxu0
    %186 = vmatpush.bf16.msra.mxu0 0
    %187 = vmatpush.bf16.msra.mxu0 0
    %188 = vmatpush.bf16.msra.mxu0 0
    %189 = vmatpush.bf16.msra.mxu0 0
    %190 = vmatpush.bf16.msra.mxu0 0
    %191 = vmatpush.bf16.msra.mxu0 0
    %192 = vmatpush.bf16.msra.mxu0 %v155
    %193 = vmatpush.bf16.msra.mxu0 %v133
    %194 = vmatmul.bf16.gmra.mxu0 %v145
    %v195 = vpop.f32.mrf.mxu0
    %v196 = vadd.f32 %v107, %v195
    %v197 = vpop.f32.mrf.mxu0
    %198 = vdwg.mxu0
    %199 = vmatpush.bf16.msra.mxu0 0
    %200 = vmatpush.bf16.msra.mxu0 0
    %201 = vmatpush.bf16.msra.mxu0 0
    %202 = vmatpush.bf16.msra.mxu0 0
    %203 = vmatpush.bf16.msra.mxu0 0
    %204 = vmatpush.bf16.msra.mxu0 0
    %205 = vmatpush.bf16.msra.mxu0 %v158
    %206 = vmatpush.bf16.msra.mxu0 %v134
    %207 = vmatmul.bf16.gmra.mxu0 %v145
    %v208 = vpop.f32.mrf.mxu0
    %v209 = vadd.f32 %v108, %v208
    %v210 = vpop.f32.mrf.mxu0
    %211 = vdwg.mxu0
    %v212 = vmax.f32 %v170, 0.0
    %v213 = vmax.f32 %v183, 0.0
    %v214 = vmax.f32 %v196, 0.0
    %v215 = vmax.f32 %v209, 0.0
    %v216 = vpack.c.bf16 %v212, %v212
    %v217 = vpack.c.bf16 %v213, %v213
    %v218 = vpack.c.bf16 %v214, %v214
    %v219 = vpack.c.bf16 %v215, %v215
    %v220 = vld [vmem:[%s3] sm:$0xff]
    %v221 = vld [vmem:[%s3 + $0x8] sm:$0xff]
    %v222 = vld [vmem:[%s3 + $0x10] sm:$0xff]
    %v223 = vld [vmem:[%s3 + $0x18] sm:$0xff]
    %v224 = vld [vmem:[%s3 + $0x20] sm:$0xff]
    %v225 = vld [vmem:[%s3 + $0x28] sm:$0xff]
    %v226 = vld [vmem:[%s3 + $0x30] sm:$0xff]
    %v227 = vld [vmem:[%s3 + $0x38] sm:$0xff]
    %v228 = vld [vmem:[%s3 + $0x40] sm:$0xff]
    %v229 = vld [vmem:[%s3 + $0x48] sm:$0xff]
    %v230 = vld [vmem:[%s3 + $0x50] sm:$0xff]
    %v231 = vld [vmem:[%s3 + $0x58] sm:$0xff]
    %v232 = vld [vmem:[%s3 + $0x60] sm:$0xff]
    %v233 = vld [vmem:[%s3 + $0x68] sm:$0xff]
    %v234 = vld [vmem:[%s3 + $0x70] sm:$0xff]
    %v235 = vld [vmem:[%s3 + $0x78] sm:$0xff]
    %v236 = vld [vmem:[%s3 + $0x80] sm:$0xff]
    %v237 = vld [vmem:[%s3 + $0x88] sm:$0xff]
    %v238 = vld [vmem:[%s3 + $0x90] sm:$0xff]
    %v239 = vld [vmem:[%s3 + $0x98] sm:$0xff]
    %v240 = vld [vmem:[%s3 + $0xa0] sm:$0xff]
    %v241 = vld [vmem:[%s3 + $0xa8] sm:$0xff]
    %v242 = vld [vmem:[%s3 + $0xb0] sm:$0xff]
    %v243 = vld [vmem:[%s3 + $0xb8] sm:$0xff]
    %v244 = vld [vmem:[%s3 + $0xc0] sm:$0xff]
    %v245 = vld [vmem:[%s3 + $0xc8] sm:$0xff]
    %v246 = vld [vmem:[%s3 + $0xd0] sm:$0xff]
    %v247 = vld [vmem:[%s3 + $0xd8] sm:$0xff]
    %v248 = vld [vmem:[%s3 + $0xe0] sm:$0xff]
    %v249 = vld [vmem:[%s3 + $0xe8] sm:$0xff]
    %v250 = vld [vmem:[%s3 + $0xf0] sm:$0xff]
    %v251 = vld [vmem:[%s3 + $0xf8] sm:$0xff]
    %v252 = vld [vmem:[%s4] sm:$0x3]
    %v254 = vperm.slane %v252, 0
    %v255 = vperm.slane %v252, 1
    %v290 = vunpack.c.l.b16 %v220
    %v291 = vunpack.c.h.b16 %v220
    %v292 = vunpack.c.l.b16 %v221
    %v293 = vunpack.c.h.b16 %v221
    %v294 = vunpack.c.l.b16 %v222
    %v295 = vunpack.c.h.b16 %v222
    %v296 = vunpack.c.l.b16 %v223
    %v297 = vunpack.c.h.b16 %v223
    %v298 = vunpack.c.l.b16 %v224
    %v299 = vunpack.c.h.b16 %v224
    %v300 = vunpack.c.l.b16 %v225
    %v301 = vunpack.c.h.b16 %v225
    %v302 = vunpack.c.l.b16 %v226
    %v303 = vunpack.c.h.b16 %v226
    %v304 = vunpack.c.l.b16 %v227
    %v305 = vunpack.c.h.b16 %v227
    %v306 = vunpack.c.l.b16 %v228
    %v307 = vunpack.c.h.b16 %v228
    %v308 = vunpack.c.l.b16 %v229
    %v309 = vunpack.c.h.b16 %v229
    %v310 = vunpack.c.l.b16 %v230
    %v311 = vunpack.c.h.b16 %v230
    %v312 = vunpack.c.l.b16 %v231
    %v313 = vunpack.c.h.b16 %v231
    %v314 = vunpack.c.l.b16 %v232
    %v315 = vunpack.c.h.b16 %v232
    %v316 = vunpack.c.l.b16 %v233
    %v317 = vunpack.c.h.b16 %v233
    %v318 = vunpack.c.l.b16 %v234
    %v319 = vunpack.c.h.b16 %v234
    %v320 = vunpack.c.l.b16 %v235
    %v321 = vunpack.c.h.b16 %v235
    %v322 = vunpack.c.l.b16 %v236
    %v323 = vunpack.c.h.b16 %v236
    %v324 = vunpack.c.l.b16 %v237
    %v325 = vunpack.c.h.b16 %v237
    %v326 = vunpack.c.l.b16 %v238
    %v327 = vunpack.c.h.b16 %v238
    %v328 = vunpack.c.l.b16 %v239
    %v329 = vunpack.c.h.b16 %v239
    %v330 = vunpack.c.l.b16 %v240
    %v331 = vunpack.c.h.b16 %v240
    %v332 = vunpack.c.l.b16 %v241
    %v333 = vunpack.c.h.b16 %v241
    %v334 = vunpack.c.l.b16 %v242
    %v335 = vunpack.c.h.b16 %v242
    %v336 = vunpack.c.l.b16 %v243
    %v337 = vunpack.c.h.b16 %v243
    %v338 = vunpack.c.l.b16 %v244
    %v339 = vunpack.c.h.b16 %v244
    %v340 = vunpack.c.l.b16 %v245
    %v341 = vunpack.c.h.b16 %v245
    %v342 = vunpack.c.l.b16 %v246
    %v343 = vunpack.c.h.b16 %v246
    %v344 = vunpack.c.l.b16 %v247
    %v345 = vunpack.c.h.b16 %v247
    %v346 = vunpack.c.l.b16 %v248
    %v347 = vunpack.c.h.b16 %v248
    %v348 = vunpack.c.l.b16 %v249
    %v349 = vunpack.c.h.b16 %v249
    %v350 = vunpack.c.l.b16 %v250
    %v351 = vunpack.c.h.b16 %v250
    %v352 = vunpack.c.l.b16 %v251
    %v353 = vunpack.c.h.b16 %v251
    %v354 = vpack.c.b16 %v292, %v290
    %v355 = vpack.c.b16 %v293, %v291
    %v356 = vpack.c.b16 %v296, %v294
    %v357 = vpack.c.b16 %v297, %v295
    %v358 = vpack.c.b16 %v300, %v298
    %v359 = vpack.c.b16 %v301, %v299
    %v360 = vpack.c.b16 %v304, %v302
    %v361 = vpack.c.b16 %v305, %v303
    %v362 = vpack.c.b16 %v308, %v306
    %v363 = vpack.c.b16 %v309, %v307
    %v364 = vpack.c.b16 %v312, %v310
    %v365 = vpack.c.b16 %v313, %v311
    %v366 = vpack.c.b16 %v316, %v314
    %v367 = vpack.c.b16 %v317, %v315
    %v368 = vpack.c.b16 %v320, %v318
    %v369 = vpack.c.b16 %v321, %v319
    %v370 = vpack.c.b16 %v324, %v322
    %v371 = vpack.c.b16 %v325, %v323
    %v372 = vpack.c.b16 %v328, %v326
    %v373 = vpack.c.b16 %v329, %v327
    %v374 = vpack.c.b16 %v332, %v330
    %v375 = vpack.c.b16 %v333, %v331
    %v376 = vpack.c.b16 %v336, %v334
    %v377 = vpack.c.b16 %v337, %v335
    %v378 = vpack.c.b16 %v340, %v338
    %v379 = vpack.c.b16 %v341, %v339
    %v380 = vpack.c.b16 %v344, %v342
    %v381 = vpack.c.b16 %v345, %v343
    %v382 = vpack.c.b16 %v348, %v346
    %v383 = vpack.c.b16 %v349, %v347
    %v384 = vpack.c.b16 %v352, %v350
    %v385 = vpack.c.b16 %v353, %v351
    %418 = vmatpush.bf16.msra.mxu0 %v368
    %419 = vmatpush.bf16.msra.mxu0 %v366
    %420 = vmatpush.bf16.msra.mxu0 %v364
    %421 = vmatpush.bf16.msra.mxu0 %v362
    %422 = vmatpush.bf16.msra.mxu0 %v360
    %423 = vmatpush.bf16.msra.mxu0 %v358
    %424 = vmatpush.bf16.msra.mxu0 %v356
    %425 = vmatpush.bf16.msra.mxu0 %v354
    %426 = vmatmul.bf16.gmra.mxu0 %v216
    %v427 = vpop.f32.mrf.mxu0
    %v428 = vadd.f32 %v254, %v427
    %v429 = vpop.f32.mrf.mxu0
    %430 = vdwg.mxu0
    %431 = vmatpush.bf16.msra.mxu0 %v384
    %432 = vmatpush.bf16.msra.mxu0 %v382
    %433 = vmatpush.bf16.msra.mxu0 %v380
    %434 = vmatpush.bf16.msra.mxu0 %v378
    %435 = vmatpush.bf16.msra.mxu0 %v376
    %436 = vmatpush.bf16.msra.mxu0 %v374
    %437 = vmatpush.bf16.msra.mxu0 %v372
    %438 = vmatpush.bf16.msra.mxu0 %v370
    %439 = vmatmul.bf16.gmra.mxu0 %v217
    %v440 = vpop.f32.mrf.mxu0
    %v441 = vadd.f32 %v428, %v440
    %v442 = vpop.f32.mrf.mxu0
    %443 = vdwg.mxu0
    %444 = vmatpush.bf16.msra.mxu0 %v369
    %445 = vmatpush.bf16.msra.mxu0 %v367
    %446 = vmatpush.bf16.msra.mxu0 %v365
    %447 = vmatpush.bf16.msra.mxu0 %v363
    %448 = vmatpush.bf16.msra.mxu0 %v361
    %449 = vmatpush.bf16.msra.mxu0 %v359
    %450 = vmatpush.bf16.msra.mxu0 %v357
    %451 = vmatpush.bf16.msra.mxu0 %v355
    %452 = vmatmul.bf16.gmra.mxu0 %v216
    %v453 = vpop.f32.mrf.mxu0
    %v454 = vadd.f32 %v255, %v453
    %v455 = vpop.f32.mrf.mxu0
    %456 = vdwg.mxu0
    %457 = vmatpush.bf16.msra.mxu0 %v385
    %458 = vmatpush.bf16.msra.mxu0 %v383
    %459 = vmatpush.bf16.msra.mxu0 %v381
    %460 = vmatpush.bf16.msra.mxu0 %v379
    %461 = vmatpush.bf16.msra.mxu0 %v377
    %462 = vmatpush.bf16.msra.mxu0 %v375
    %463 = vmatpush.bf16.msra.mxu0 %v373
    %464 = vmatpush.bf16.msra.mxu0 %v371
    %465 = vmatmul.bf16.gmra.mxu0 %v217
    %v466 = vpop.f32.mrf.mxu0
    %v467 = vadd.f32 %v454, %v466
    %v468 = vpop.f32.mrf.mxu0
    %469 = vdwg.mxu0
    %v470 = vmax.f32 %v441, 0.0
    %v471 = vmax.f32 %v467, 0.0
    %v472 = vld [vmem:[#allocation8] sm:$0xff]
    %v473 = vld [vmem:[#allocation8 + $0x8] sm:$0xff]
    %v474 = vld [vmem:[#allocation8 + $0x10] sm:$0xff]
    %v475 = vld [vmem:[#allocation8 + $0x18] sm:$0xff]
    %v476 = vld [vmem:[#allocation8 + $0x20] sm:$0xff]
    %v477 = vld [vmem:[#allocation8 + $0x28] sm:$0xff]
    %v478 = vld [vmem:[#allocation8 + $0x30] sm:$0xff]
    %v479 = vld [vmem:[#allocation8 + $0x38] sm:$0xff]
    %v480 = vld [vmem:[#allocation8 + $0x40] sm:$0xff]
    %v481 = vld [vmem:[#allocation8 + $0x48] sm:$0xff]
    %v482 = vld [vmem:[#allocation8 + $0x50] sm:$0xff]
    %v483 = vld [vmem:[#allocation8 + $0x58] sm:$0xff]
    %v484 = vld [vmem:[#allocation8 + $0x60] sm:$0xff]
    %v485 = vld [vmem:[#allocation8 + $0x68] sm:$0xff]
    %v486 = vld [vmem:[#allocation8 + $0x70] sm:$0xff]
    %v487 = vld [vmem:[#allocation8 + $0x78] sm:$0xff]
    %v488 = vld [vmem:[#allocation8 + $0x80] sm:$0xff]
    %v489 = vld [vmem:[#allocation8 + $0x88] sm:$0xff]
    %v490 = vld [vmem:[#allocation8 + $0x90] sm:$0xff]
    %v491 = vld [vmem:[#allocation8 + $0x98] sm:$0xff]
    %v492 = vld [vmem:[#allocation8 + $0xa0] sm:$0xff]
    %v493 = vld [vmem:[#allocation8 + $0xa8] sm:$0xff]
    %v494 = vld [vmem:[#allocation8 + $0xb0] sm:$0xff]
    %v495 = vld [vmem:[#allocation8 + $0xb8] sm:$0xff]
    %v496 = vld [vmem:[#allocation8 + $0xc0] sm:$0xff]
    %v497 = vld [vmem:[#allocation8 + $0xc8] sm:$0xff]
    %v498 = vld [vmem:[#allocation8 + $0xd0] sm:$0xff]
    %v499 = vld [vmem:[#allocation8 + $0xd8] sm:$0xff]
    %v500 = vld [vmem:[#allocation8 + $0xe0] sm:$0xff]
    %v501 = vld [vmem:[#allocation8 + $0xe8] sm:$0xff]
    %v502 = vld [vmem:[#allocation8 + $0xf0] sm:$0xff]
    %v503 = vld [vmem:[#allocation8 + $0xf8] sm:$0xff]
    %v504 = vld [vmem:[%s6] sm:$0x3]
    %v506 = vperm.slane %v504, 0
    %v507 = vperm.slane %v504, 1
    %v542 = vunpack.c.l.b16 %v472
    %v543 = vunpack.c.h.b16 %v472
    %v544 = vunpack.c.l.b16 %v473
    %v545 = vunpack.c.h.b16 %v473
    %v546 = vunpack.c.l.b16 %v474
    %v547 = vunpack.c.h.b16 %v474
    %v548 = vunpack.c.l.b16 %v475
    %v549 = vunpack.c.h.b16 %v475
    %v550 = vunpack.c.l.b16 %v476
    %v551 = vunpack.c.h.b16 %v476
    %v552 = vunpack.c.l.b16 %v477
    %v553 = vunpack.c.h.b16 %v477
    %v554 = vunpack.c.l.b16 %v478
    %v555 = vunpack.c.h.b16 %v478
    %v556 = vunpack.c.l.b16 %v479
    %v557 = vunpack.c.h.b16 %v479
    %v558 = vunpack.c.l.b16 %v480
    %v559 = vunpack.c.h.b16 %v480
    %v560 = vunpack.c.l.b16 %v481
    %v561 = vunpack.c.h.b16 %v481
    %v562 = vunpack.c.l.b16 %v482
    %v563 = vunpack.c.h.b16 %v482
    %v564 = vunpack.c.l.b16 %v483
    %v565 = vunpack.c.h.b16 %v483
    %v566 = vunpack.c.l.b16 %v484
    %v567 = vunpack.c.h.b16 %v484
    %v568 = vunpack.c.l.b16 %v485
    %v569 = vunpack.c.h.b16 %v485
    %v570 = vunpack.c.l.b16 %v486
    %v571 = vunpack.c.h.b16 %v486
    %v572 = vunpack.c.l.b16 %v487
    %v573 = vunpack.c.h.b16 %v487
    %v574 = vunpack.c.l.b16 %v488
    %v575 = vunpack.c.h.b16 %v488
    %v576 = vunpack.c.l.b16 %v489
    %v577 = vunpack.c.h.b16 %v489
    %v578 = vunpack.c.l.b16 %v490
    %v579 = vunpack.c.h.b16 %v490
    %v580 = vunpack.c.l.b16 %v491
    %v581 = vunpack.c.h.b16 %v491
    %v582 = vunpack.c.l.b16 %v492
    %v583 = vunpack.c.h.b16 %v492
    %v584 = vunpack.c.l.b16 %v493
    %v585 = vunpack.c.h.b16 %v493
    %v586 = vunpack.c.l.b16 %v494
    %v587 = vunpack.c.h.b16 %v494
    %v588 = vunpack.c.l.b16 %v495
    %v589 = vunpack.c.h.b16 %v495
    %v590 = vunpack.c.l.b16 %v496
    %v591 = vunpack.c.h.b16 %v496
    %v592 = vunpack.c.l.b16 %v497
    %v593 = vunpack.c.h.b16 %v497
    %v594 = vunpack.c.l.b16 %v498
    %v595 = vunpack.c.h.b16 %v498
    %v596 = vunpack.c.l.b16 %v499
    %v597 = vunpack.c.h.b16 %v499
    %v598 = vunpack.c.l.b16 %v500
    %v599 = vunpack.c.h.b16 %v500
    %v600 = vunpack.c.l.b16 %v501
    %v601 = vunpack.c.h.b16 %v501
    %v602 = vunpack.c.l.b16 %v502
    %v603 = vunpack.c.h.b16 %v502
    %v604 = vunpack.c.l.b16 %v503
    %v605 = vunpack.c.h.b16 %v503
    %v606 = vpack.c.b16 %v544, %v542
    %v607 = vpack.c.b16 %v545, %v543
    %v608 = vpack.c.b16 %v548, %v546
    %v609 = vpack.c.b16 %v549, %v547
    %v610 = vpack.c.b16 %v552, %v550
    %v611 = vpack.c.b16 %v553, %v551
    %v612 = vpack.c.b16 %v556, %v554
    %v613 = vpack.c.b16 %v557, %v555
    %v614 = vpack.c.b16 %v560, %v558
    %v615 = vpack.c.b16 %v561, %v559
    %v616 = vpack.c.b16 %v564, %v562
    %v617 = vpack.c.b16 %v565, %v563
    %v618 = vpack.c.b16 %v568, %v566
    %v619 = vpack.c.b16 %v569, %v567
    %v620 = vpack.c.b16 %v572, %v570
    %v621 = vpack.c.b16 %v573, %v571
    %v622 = vpack.c.b16 %v576, %v574
    %v623 = vpack.c.b16 %v577, %v575
    %v624 = vpack.c.b16 %v580, %v578
    %v625 = vpack.c.b16 %v581, %v579
    %v626 = vpack.c.b16 %v584, %v582
    %v627 = vpack.c.b16 %v585, %v583
    %v628 = vpack.c.b16 %v588, %v586
    %v629 = vpack.c.b16 %v589, %v587
    %v630 = vpack.c.b16 %v592, %v590
    %v631 = vpack.c.b16 %v593, %v591
    %v632 = vpack.c.b16 %v596, %v594
    %v633 = vpack.c.b16 %v597, %v595
    %v634 = vpack.c.b16 %v600, %v598
    %v635 = vpack.c.b16 %v601, %v599
    %v636 = vpack.c.b16 %v604, %v602
    %v637 = vpack.c.b16 %v605, %v603
    %670 = vmatpush.bf16.msra.mxu0 %v620
    %671 = vmatpush.bf16.msra.mxu0 %v618
    %672 = vmatpush.bf16.msra.mxu0 %v616
    %673 = vmatpush.bf16.msra.mxu0 %v614
    %674 = vmatpush.bf16.msra.mxu0 %v612
    %675 = vmatpush.bf16.msra.mxu0 %v610
    %676 = vmatpush.bf16.msra.mxu0 %v608
    %677 = vmatpush.bf16.msra.mxu0 %v606
    %678 = vmatmul.bf16.gmra.mxu0 %v218
    %v679 = vpop.f32.mrf.mxu0
    %v680 = vadd.f32 %v506, %v679
    %v681 = vpop.f32.mrf.mxu0
    %682 = vdwg.mxu0
    %683 = vmatpush.bf16.msra.mxu0 %v636
    %684 = vmatpush.bf16.msra.mxu0 %v634
    %685 = vmatpush.bf16.msra.mxu0 %v632
    %686 = vmatpush.bf16.msra.mxu0 %v630
    %687 = vmatpush.bf16.msra.mxu0 %v628
    %688 = vmatpush.bf16.msra.mxu0 %v626
    %689 = vmatpush.bf16.msra.mxu0 %v624
    %690 = vmatpush.bf16.msra.mxu0 %v622
    %691 = vmatmul.bf16.gmra.mxu0 %v219
    %v692 = vpop.f32.mrf.mxu0
    %v693 = vadd.f32 %v680, %v692
    %v694 = vpop.f32.mrf.mxu0
    %695 = vdwg.mxu0
    %696 = vmatpush.bf16.msra.mxu0 %v621
    %697 = vmatpush.bf16.msra.mxu0 %v619
    %698 = vmatpush.bf16.msra.mxu0 %v617
    %699 = vmatpush.bf16.msra.mxu0 %v615
    %700 = vmatpush.bf16.msra.mxu0 %v613
    %701 = vmatpush.bf16.msra.mxu0 %v611
    %702 = vmatpush.bf16.msra.mxu0 %v609
    %703 = vmatpush.bf16.msra.mxu0 %v607
    %704 = vmatmul.bf16.gmra.mxu0 %v218
    %v705 = vpop.f32.mrf.mxu0
    %v706 = vadd.f32 %v507, %v705
    %v707 = vpop.f32.mrf.mxu0
    %708 = vdwg.mxu0
    %709 = vmatpush.bf16.msra.mxu0 %v637
    %710 = vmatpush.bf16.msra.mxu0 %v635
    %711 = vmatpush.bf16.msra.mxu0 %v633
    %712 = vmatpush.bf16.msra.mxu0 %v631
    %713 = vmatpush.bf16.msra.mxu0 %v629
    %714 = vmatpush.bf16.msra.mxu0 %v627
    %715 = vmatpush.bf16.msra.mxu0 %v625
    %716 = vmatpush.bf16.msra.mxu0 %v623
    %717 = vmatmul.bf16.gmra.mxu0 %v219
    %v718 = vpop.f32.mrf.mxu0
    %v719 = vadd.f32 %v706, %v718
    %v720 = vpop.f32.mrf.mxu0
    %721 = vdwg.mxu0
    %v722 = vmax.f32 %v693, 0.0
    %v723 = vmax.f32 %v719, 0.0
    %v724 = vpack.c.bf16 %v470, %v470
    %v725 = vpack.c.bf16 %v471, %v471
    %v726 = vld [vmem:[%s7] sm:$0xf]
    %v727 = vld [vmem:[%s7 + $0x4] sm:$0xf]
    %v728 = vld [vmem:[%s7 + $0x8] sm:$0xf]
    %v729 = vld [vmem:[%s7 + $0xc] sm:$0xf]
    %v730 = vld [vmem:[%s7 + $0x10] sm:$0xf]
    %v731 = vld [vmem:[%s7 + $0x14] sm:$0xf]
    %v732 = vld [vmem:[%s7 + $0x18] sm:$0xf]
    %v733 = vld [vmem:[%s7 + $0x1c] sm:$0xf]
    %v734 = vld [vmem:[%s7 + $0x20] sm:$0xf]
    %v735 = vld [vmem:[%s7 + $0x24] sm:$0xf]
    %v736 = vld [vmem:[%s7 + $0x28] sm:$0xf]
    %v737 = vld [vmem:[%s7 + $0x2c] sm:$0xf]
    %v738 = vld [vmem:[%s7 + $0x30] sm:$0xf]
    %v739 = vld [vmem:[%s7 + $0x34] sm:$0xf]
    %v740 = vld [vmem:[%s7 + $0x38] sm:$0xf]
    %v741 = vld [vmem:[%s7 + $0x3c] sm:$0xf]
    %v742 = vld [vmem:[%s7 + $0x40] sm:$0xf]
    %v743 = vld [vmem:[%s7 + $0x44] sm:$0xf]
    %v744 = vld [vmem:[%s7 + $0x48] sm:$0xf]
    %v745 = vld [vmem:[%s7 + $0x4c] sm:$0xf]
    %v746 = vld [vmem:[%s7 + $0x50] sm:$0xf]
    %v747 = vld [vmem:[%s7 + $0x54] sm:$0xf]
    %v748 = vld [vmem:[%s7 + $0x58] sm:$0xf]
    %v749 = vld [vmem:[%s7 + $0x5c] sm:$0xf]
    %v750 = vld [vmem:[%s7 + $0x60] sm:$0xf]
    %v751 = vld [vmem:[%s7 + $0x64] sm:$0xf]
    %v752 = vld [vmem:[%s7 + $0x68] sm:$0xf]
    %v753 = vld [vmem:[%s7 + $0x6c] sm:$0xf]
    %v754 = vld [vmem:[%s7 + $0x70] sm:$0xf]
    %v755 = vld [vmem:[%s7 + $0x74] sm:$0xf]
    %v756 = vld [vmem:[%s7 + $0x78] sm:$0xf]
    %v757 = vld [vmem:[%s7 + $0x7c] sm:$0xf]
    %v758 = vpack.c.bf16 %v722, %v722
    %v759 = vpack.c.bf16 %v723, %v723
    %v760 = vld [vmem:[%s8] sm:$0xf]
    %v761 = vld [vmem:[%s8 + $0x4] sm:$0xf]
    %v762 = vld [vmem:[%s8 + $0x8] sm:$0xf]
    %v763 = vld [vmem:[%s8 + $0xc] sm:$0xf]
    %v764 = vld [vmem:[%s8 + $0x10] sm:$0xf]
    %v765 = vld [vmem:[%s8 + $0x14] sm:$0xf]
    %v766 = vld [vmem:[%s8 + $0x18] sm:$0xf]
    %v767 = vld [vmem:[%s8 + $0x1c] sm:$0xf]
    %v768 = vld [vmem:[%s8 + $0x20] sm:$0xf]
    %v769 = vld [vmem:[%s8 + $0x24] sm:$0xf]
    %v770 = vld [vmem:[%s8 + $0x28] sm:$0xf]
    %v771 = vld [vmem:[%s8 + $0x2c] sm:$0xf]
    %v772 = vld [vmem:[%s8 + $0x30] sm:$0xf]
    %v773 = vld [vmem:[%s8 + $0x34] sm:$0xf]
    %v774 = vld [vmem:[%s8 + $0x38] sm:$0xf]
    %v775 = vld [vmem:[%s8 + $0x3c] sm:$0xf]
    %v776 = vld [vmem:[%s8 + $0x40] sm:$0xf]
    %v777 = vld [vmem:[%s8 + $0x44] sm:$0xf]
    %v778 = vld [vmem:[%s8 + $0x48] sm:$0xf]
    %v779 = vld [vmem:[%s8 + $0x4c] sm:$0xf]
    %v780 = vld [vmem:[%s8 + $0x50] sm:$0xf]
    %v781 = vld [vmem:[%s8 + $0x54] sm:$0xf]
    %v782 = vld [vmem:[%s8 + $0x58] sm:$0xf]
    %v783 = vld [vmem:[%s8 + $0x5c] sm:$0xf]
    %v784 = vld [vmem:[%s8 + $0x60] sm:$0xf]
    %v785 = vld [vmem:[%s8 + $0x64] sm:$0xf]
    %v786 = vld [vmem:[%s8 + $0x68] sm:$0xf]
    %v787 = vld [vmem:[%s8 + $0x6c] sm:$0xf]
    %v788 = vld [vmem:[%s8 + $0x70] sm:$0xf]
    %v789 = vld [vmem:[%s8 + $0x74] sm:$0xf]
    %v790 = vld [vmem:[%s8 + $0x78] sm:$0xf]
    %v791 = vld [vmem:[%s8 + $0x7c] sm:$0xf]
    %v824 = vunpack.c.l.b16 %v760
    %v825 = vunpack.c.l.b16 %v761
    %v826 = vunpack.c.l.b16 %v762
    %v827 = vunpack.c.l.b16 %v763
    %v828 = vunpack.c.l.b16 %v764
    %v829 = vunpack.c.l.b16 %v765
    %v830 = vunpack.c.l.b16 %v766
    %v831 = vunpack.c.l.b16 %v767
    %v832 = vunpack.c.l.b16 %v768
    %v833 = vunpack.c.l.b16 %v769
    %v834 = vunpack.c.l.b16 %v770
    %v835 = vunpack.c.l.b16 %v771
    %v836 = vunpack.c.l.b16 %v772
    %v837 = vunpack.c.l.b16 %v773
    %v838 = vunpack.c.l.b16 %v774
    %v839 = vunpack.c.l.b16 %v775
    %v840 = vunpack.c.l.b16 %v776
    %v841 = vunpack.c.l.b16 %v777
    %v842 = vunpack.c.l.b16 %v778
    %v843 = vunpack.c.l.b16 %v779
    %v844 = vunpack.c.l.b16 %v780
    %v845 = vunpack.c.l.b16 %v781
    %v846 = vunpack.c.l.b16 %v782
    %v847 = vunpack.c.l.b16 %v783
    %v848 = vunpack.c.l.b16 %v784
    %v849 = vunpack.c.l.b16 %v785
    %v850 = vunpack.c.l.b16 %v786
    %v851 = vunpack.c.l.b16 %v787
    %v852 = vunpack.c.l.b16 %v788
    %v853 = vunpack.c.l.b16 %v789
    %v854 = vunpack.c.l.b16 %v790
    %v855 = vunpack.c.l.b16 %v791
    %v856 = vpack.c.b16 %v825, %v824
    %v857 = vpack.c.b16 %v827, %v826
    %v858 = vpack.c.b16 %v829, %v828
    %v859 = vpack.c.b16 %v831, %v830
    %v860 = vpack.c.b16 %v833, %v832
    %v861 = vpack.c.b16 %v835, %v834
    %v862 = vpack.c.b16 %v837, %v836
    %v863 = vpack.c.b16 %v839, %v838
    %v864 = vpack.c.b16 %v841, %v840
    %v865 = vpack.c.b16 %v843, %v842
    %v866 = vpack.c.b16 %v845, %v844
    %v867 = vpack.c.b16 %v847, %v846
    %v868 = vpack.c.b16 %v849, %v848
    %v869 = vpack.c.b16 %v851, %v850
    %v870 = vpack.c.b16 %v853, %v852
    %v871 = vpack.c.b16 %v855, %v854
    %888 = vmatpush.bf16.msra.mxu0 %v863
    %889 = vmatpush.bf16.msra.mxu0 %v862
    %890 = vmatpush.bf16.msra.mxu0 %v861
    %891 = vmatpush.bf16.msra.mxu0 %v860
    %892 = vmatpush.bf16.msra.mxu0 %v859
    %893 = vmatpush.bf16.msra.mxu0 %v858
    %894 = vmatpush.bf16.msra.mxu0 %v857
    %895 = vmatpush.bf16.msra.mxu0 %v856
    %896 = vmatmul.bf16.gmra.mxu0 %v758
    %v897 = vpop.f32.mrf.mxu0
    %v898 = vadd.f32 0.0, %v897
    %v899 = vpop.f32.mrf.mxu0
    %900 = vdwg.mxu0
    %901 = vmatpush.bf16.msra.mxu0 %v871
    %902 = vmatpush.bf16.msra.mxu0 %v870
    %903 = vmatpush.bf16.msra.mxu0 %v869
    %904 = vmatpush.bf16.msra.mxu0 %v868
    %905 = vmatpush.bf16.msra.mxu0 %v867
    %906 = vmatpush.bf16.msra.mxu0 %v866
    %907 = vmatpush.bf16.msra.mxu0 %v865
    %908 = vmatpush.bf16.msra.mxu0 %v864
    %909 = vmatmul.bf16.gmra.mxu0 %v759
    %v910 = vpop.f32.mrf.mxu0
    %v911 = vadd.f32 %v898, %v910
    %v912 = vpop.f32.mrf.mxu0
    %913 = vdwg.mxu0
    %v946 = vunpack.c.l.b16 %v726
    %v947 = vunpack.c.l.b16 %v727
    %v948 = vunpack.c.l.b16 %v728
    %v949 = vunpack.c.l.b16 %v729
    %v950 = vunpack.c.l.b16 %v730
    %v951 = vunpack.c.l.b16 %v731
    %v952 = vunpack.c.l.b16 %v732
    %v953 = vunpack.c.l.b16 %v733
    %v954 = vunpack.c.l.b16 %v734
    %v955 = vunpack.c.l.b16 %v735
    %v956 = vunpack.c.l.b16 %v736
    %v957 = vunpack.c.l.b16 %v737
    %v958 = vunpack.c.l.b16 %v738
    %v959 = vunpack.c.l.b16 %v739
    %v960 = vunpack.c.l.b16 %v740
    %v961 = vunpack.c.l.b16 %v741
    %v962 = vunpack.c.l.b16 %v742
    %v963 = vunpack.c.l.b16 %v743
    %v964 = vunpack.c.l.b16 %v744
    %v965 = vunpack.c.l.b16 %v745
    %v966 = vunpack.c.l.b16 %v746
    %v967 = vunpack.c.l.b16 %v747
    %v968 = vunpack.c.l.b16 %v748
    %v969 = vunpack.c.l.b16 %v749
    %v970 = vunpack.c.l.b16 %v750
    %v971 = vunpack.c.l.b16 %v751
    %v972 = vunpack.c.l.b16 %v752
    %v973 = vunpack.c.l.b16 %v753
    %v974 = vunpack.c.l.b16 %v754
    %v975 = vunpack.c.l.b16 %v755
    %v976 = vunpack.c.l.b16 %v756
    %v977 = vunpack.c.l.b16 %v757
    %v978 = vpack.c.b16 %v947, %v946
    %v979 = vpack.c.b16 %v949, %v948
    %v980 = vpack.c.b16 %v951, %v950
    %v981 = vpack.c.b16 %v953, %v952
    %v982 = vpack.c.b16 %v955, %v954
    %v983 = vpack.c.b16 %v957, %v956
    %v984 = vpack.c.b16 %v959, %v958
    %v985 = vpack.c.b16 %v961, %v960
    %v986 = vpack.c.b16 %v963, %v962
    %v987 = vpack.c.b16 %v965, %v964
    %v988 = vpack.c.b16 %v967, %v966
    %v989 = vpack.c.b16 %v969, %v968
    %v990 = vpack.c.b16 %v971, %v970
    %v991 = vpack.c.b16 %v973, %v972
    %v992 = vpack.c.b16 %v975, %v974
    %v993 = vpack.c.b16 %v977, %v976
    %1010 = vmatpush.bf16.msra.mxu0 %v985
    %1011 = vmatpush.bf16.msra.mxu0 %v984
    %1012 = vmatpush.bf16.msra.mxu0 %v983
    %1013 = vmatpush.bf16.msra.mxu0 %v982
    %1014 = vmatpush.bf16.msra.mxu0 %v981
    %1015 = vmatpush.bf16.msra.mxu0 %v980
    %1016 = vmatpush.bf16.msra.mxu0 %v979
    %1017 = vmatpush.bf16.msra.mxu0 %v978
    %1018 = vmatmul.bf16.gmra.mxu0 %v724
    %v1019 = vpop.f32.mrf.mxu0
    %v1020 = vadd.f32 %v911, %v1019
    %v1021 = vpop.f32.mrf.mxu0
    %1022 = vdwg.mxu0
    %1023 = vmatpush.bf16.msra.mxu0 %v993
    %1024 = vmatpush.bf16.msra.mxu0 %v992
    %1025 = vmatpush.bf16.msra.mxu0 %v991
    %1026 = vmatpush.bf16.msra.mxu0 %v990
    %1027 = vmatpush.bf16.msra.mxu0 %v989
    %1028 = vmatpush.bf16.msra.mxu0 %v988
    %1029 = vmatpush.bf16.msra.mxu0 %v987
    %1030 = vmatpush.bf16.msra.mxu0 %v986
    %1031 = vmatmul.bf16.gmra.mxu0 %v725
    %v1032 = vpop.f32.mrf.mxu0
    %v1033 = vadd.f32 %v1020, %v1032
    %v1034 = vpop.f32.mrf.mxu0
    %1035 = vdwg.mxu0
    %v1036 = vld [vmem:[%s9] sm:$0x1]
    %v1038 = vperm.slane %v1036, 0
    %v1040 = vadd.f32 %v1033, %v1038
    %vm1041 = vcmask 9216
    %1042 = vst.msk [vmem:[#allocation10] sm:$0x3] %vm1041, %v1040
    // Predicated region
    $region58: #{tpu_custom_call.1} parent=1 // pred_check
      _
    $region59: #{tpu_custom_call.1} parent=1 // pred_check_branch
      %1044 = sbr.rel (0) target = $region61
    $region60: #{tpu_custom_call.1} parent=1 // pred_region
      %1046 = vsyncadd [#allocation4], 0
      %s1048 = sshll.u32 [#allocation10], 4
      %s1049 = int_to_ptr.vmem [resolvable:$true] %s1048
      %s1050 = sshll.u32 %s10, 4
      %s1051 = int_to_ptr.hbm [resolvable:$true] %s1050
      %1053 = dma.vmem_to_hbm [thread:$0]  %s1049, 32, %s1051, [#allocation4]
    $region61: #{tpu_custom_call.1} parent=1 // pred_fallthru
      _
    // Predicated region
    $region62: #{tpu_custom_call.1} parent=1 // pred_check
      _
    $region63: #{tpu_custom_call.1} parent=1 // pred_check_branch
      %1055 = sbr.rel (0) target = $region65
    $region64: #{tpu_custom_call.1} parent=1 // pred_region
      %1057 = dma.done [#allocation4], 32
    $region65: #{tpu_custom_call.1} parent=1 // pred_fallthru
      _
    %1058 = vsyncpa [#allocation3], 1
    %1059 = vsyncpa [#allocation6], 1
    %1060 = vsyncpa [#allocation9], 1
    %1061 = vsyncpa [#allocation4], 1

</llo_original>
